<compile_context>
chip_gen: v5e
topology: v5e:2x2
jax: 0.10.0
libtpu: 0.0.40
codegen_flags: <defaults>
</compile_context>

<pallas_src>
import functools

import jax
import jax.numpy as jnp
from jax.experimental import pallas as pl
from jax.experimental.pallas import tpu as pltpu

_IGNORE_INDEX = -100
_VMEM_LIMIT_BYTES = 32 * 1024 * 1024          # explicit; safe on v5e/v6e/v7x
_TARGET_TILE_BYTES = 2 * 1024 * 1024          # per logits block (x2 inputs x2 buffers fits)


def _pick_tile_n(n_rows, n_cols, itemsize, tile_n=None):
    """Choose a sublane-aligned row tile bounded by a VMEM byte budget."""
    if tile_n is None:
        t = _TARGET_TILE_BYTES // max(1, n_cols * itemsize)
        t = int(max(8, min(512, t)))
    else:
        t = int(tile_n)
    if t >= n_rows:
        return n_rows                          # single block == full dim (always legal)
    return max(8, (t // 8) * 8)                # multiple of 8 sublanes


# ---------------------------------------------------------------------------
# Kernel 1: cross-entropy with integer class-index targets
# (PyTorch path when pred.shape != target.shape: pred (N, C), target (N,)).
# loss = sum_{i valid} [ logsumexp(logits_i) - logits_i[label_i] ] / #valid
# where valid == (label_i != ignore_index) (PyTorch default ignore_index=-100).
# ---------------------------------------------------------------------------
def _ce_index_kernel(logits_ref, labels_ref, loss_ref, sum_sc, cnt_sc, *,
                     n_rows, tile_n, ignore_index):
    i = pl.program_id(0)

    @pl.when(i == 0)
    def _():
        sum_sc[...] = jnp.zeros_like(sum_sc)
        cnt_sc[...] = jnp.zeros_like(cnt_sc)

    logits = logits_ref[...].astype(jnp.float32)                 # (tile_n, C)
    labels = labels_ref[...]                                      # (tile_n, 1) int32

    # mask rows that fall past N (partial last tile) and ignored labels
    row = jax.lax.broadcasted_iota(jnp.int32, (tile_n, 1), 0) + i * tile_n
    row_valid = row < n_rows                                      # (tile_n, 1)
    valid = row_valid & (labels != ignore_index)                  # (tile_n, 1)

    # zero out garbage rows (OOB tile padding) so the LSE stays finite
    safe_logits = jnp.where(row_valid, logits, 0.0)

    # numerically-stable log-sum-exp over the class (lane) axis
    m = jnp.max(safe_logits, axis=-1, keepdims=True)              # (tile_n, 1)
    lse = m + jnp.log(jnp.sum(jnp.exp(safe_logits - m), axis=-1, keepdims=True))

    # gather logits[i, label_i] via one-hot compare (no dynamic gather on TPU vregs)
    col = jax.lax.broadcasted_iota(jnp.int32, safe_logits.shape, 1)
    onehot = col == labels
    picked = jnp.sum(jnp.where(onehot, safe_logits, 0.0), axis=-1, keepdims=True)

    per_row = jnp.where(valid, lse - picked, 0.0)                 # (tile_n, 1)
    sum_sc[...] += jnp.sum(per_row)
    cnt_sc[...] += jnp.sum(valid.astype(jnp.float32))

    @pl.when(i == pl.num_programs(0) - 1)
    def _():
        loss_ref[...] = sum_sc[...] / cnt_sc[...]


# ---------------------------------------------------------------------------
# Kernel 2: cross-entropy with probability (soft) targets
# (PyTorch path when pred.shape == target.shape).
# loss = mean_i [ -sum_c target[i, c] * log_softmax(logits)[i, c] ]
# ---------------------------------------------------------------------------
def _ce_soft_kernel(logits_ref, target_ref, loss_ref, sum_sc, *, n_rows, tile_n):
    i = pl.program_id(0)

    @pl.when(i == 0)
    def _():
        sum_sc[...] = jnp.zeros_like(sum_sc)

    logits = logits_ref[...].astype(jnp.float32)                  # (tile_n, C)
    tgt = target_ref[...].astype(jnp.float32)                     # (tile_n, C)

    row = jax.lax.broadcasted_iota(jnp.int32, (tile_n, 1), 0) + i * tile_n
    row_valid = row < n_rows

    safe_logits = jnp.where(row_valid, logits, 0.0)
    safe_tgt = jnp.where(row_valid, tgt, 0.0)

    m = jnp.max(safe_logits, axis=-1, keepdims=True)
    logz = m + jnp.log(jnp.sum(jnp.exp(safe_logits - m), axis=-1, keepdims=True))
    logp = safe_logits - logz                                     # log_softmax

    per_row = -jnp.sum(safe_tgt * logp, axis=-1, keepdims=True)   # (tile_n, 1)
    sum_sc[...] += jnp.sum(per_row)

    @pl.when(i == pl.num_programs(0) - 1)
    def _():
        loss_ref[...] = sum_sc[...] / jnp.float32(n_rows)


# ---------------------------------------------------------------------------
# Wrappers
# ---------------------------------------------------------------------------
def cross_entropy_index(logits, labels, *, ignore_index=_IGNORE_INDEX, tile_n=None):
    """logits: (N, C), labels: (N,) int -> scalar mean CE loss (ignore_index aware)."""
    n, c = logits.shape
    labels2d = labels.reshape(n, 1).astype(jnp.int32)
    tn = _pick_tile_n(n, c, jnp.dtype(logits.dtype).itemsize, tile_n)
    grid = (pl.cdiv(n, tn),)
    out = pl.pallas_call(
        functools.partial(_ce_index_kernel, n_rows=n, tile_n=tn,
                          ignore_index=ignore_index),
        out_shape=jax.ShapeDtypeStruct((1, 1), jnp.float32),
        grid_spec=pltpu.PrefetchScalarGridSpec(
            num_scalar_prefetch=0,
            grid=grid,
            in_specs=[pl.BlockSpec((tn, c), lambda i: (i, 0)),
                      pl.BlockSpec((tn, 1), lambda i: (i, 0))],
            out_specs=pl.BlockSpec((1, 1), lambda i: (0, 0)),
            scratch_shapes=[pltpu.VMEM((1, 1), jnp.float32),
                            pltpu.VMEM((1, 1), jnp.float32)]),
        compiler_params=pltpu.CompilerParams(
            dimension_semantics=("arbitrary",),
            vmem_limit_bytes=_VMEM_LIMIT_BYTES),
    )(logits, labels2d)
    return out[0, 0]


def cross_entropy_soft(logits, target, *, tile_n=None):
    """logits, target: (N, C) float -> scalar mean CE loss (prob targets)."""
    n, c = logits.shape
    itemsize = max(jnp.dtype(logits.dtype).itemsize, jnp.dtype(target.dtype).itemsize)
    tn = _pick_tile_n(n, c, itemsize, tile_n)
    grid = (pl.cdiv(n, tn),)
    out = pl.pallas_call(
        functools.partial(_ce_soft_kernel, n_rows=n, tile_n=tn),
        out_shape=jax.ShapeDtypeStruct((1, 1), jnp.float32),
        grid_spec=pltpu.PrefetchScalarGridSpec(
            num_scalar_prefetch=0,
            grid=grid,
            in_specs=[pl.BlockSpec((tn, c), lambda i: (i, 0)),
                      pl.BlockSpec((tn, c), lambda i: (i, 0))],
            out_specs=pl.BlockSpec((1, 1), lambda i: (0, 0)),
            scratch_shapes=[pltpu.VMEM((1, 1), jnp.float32)]),
        compiler_params=pltpu.CompilerParams(
            dimension_semantics=("arbitrary",),
            vmem_limit_bytes=_VMEM_LIMIT_BYTES),
    )(logits, target)
    return out[0, 0]


class ClassificationCELoss:
    """JAX/Pallas port of dioscuri ClassificationCELoss forward semantics."""

    def __init__(self, tile_n=None, **kwargs):
        self.tile_n = tile_n

    def __call__(self, pred, batch):
        logits = pred["logit"] if isinstance(pred, dict) else pred
        target = batch["label"] if isinstance(batch, dict) else batch
        if logits.shape == target.shape:
            loss = cross_entropy_soft(logits, target, tile_n=self.tile_n)
        else:
            target = target.reshape(-1)
            loss = cross_entropy_index(logits, target, tile_n=self.tile_n)
        loss_dict = {"loss": loss}
        return loss, loss_dict


if __name__ == "__main__":
    key = jax.random.PRNGKey(0)
    k_logit, k_label, k_soft = jax.random.split(key, 3)

    N, C = 20, 32
    TILE = 8   # small tile so the demo exercises the grid + partial-tile masking

    logits = jax.random.normal(k_logit, (N, C), dtype=jnp.float32)
    labels = jax.random.randint(k_label, (N,), 0, C, dtype=jnp.int32)
    labels = labels.at[3].set(_IGNORE_INDEX)   # exercise ignore_index=-100 semantics

    criterion = ClassificationCELoss(tile_n=TILE)

    # --- class-index target path (pred.shape != target.shape) ---
    loss, loss_dict = criterion({"logit": logits}, {"label": labels})
    loss = jax.block_until_ready(loss)

    logp_ref = jax.nn.log_softmax(logits, axis=-1)
    valid = labels != _IGNORE_INDEX
    picked = logp_ref[jnp.arange(N), jnp.clip(labels, 0, C - 1)]
    ref = -(jnp.sum(jnp.where(valid, picked, 0.0)) / jnp.sum(valid))
    assert jnp.allclose(loss, ref, atol=1e-5, rtol=1e-5), (loss, ref)

    # --- soft-target path (pred.shape == target.shape) ---
    soft_target = jax.nn.softmax(jax.random.normal(k_soft, (N, C)), axis=-1)
    loss2, _ = criterion(logits, soft_target)
    loss2 = jax.block_until_ready(loss2)
    ref2 = -jnp.mean(jnp.sum(soft_target * logp_ref, axis=-1))
    assert jnp.allclose(loss2, ref2, atol=1e-5, rtol=1e-5), (loss2, ref2)

    # --- bf16 logits pass-through (half the HBM read traffic; upcast in-kernel) ---
    logits_bf16 = logits.astype(jnp.bfloat16)
    loss3, _ = criterion({"logit": logits_bf16}, {"label": labels})
    loss3 = jax.block_until_ready(loss3)
    logp_bf = jax.nn.log_softmax(logits_bf16.astype(jnp.float32), axis=-1)
    picked_bf = logp_bf[jnp.arange(N), jnp.clip(labels, 0, C - 1)]
    ref3 = -(jnp.sum(jnp.where(valid, picked_bf, 0.0)) / jnp.sum(valid))
    assert jnp.allclose(loss3, ref3, atol=1e-4, rtol=1e-4), (loss3, ref3)

    print("KERNEL_OK")
</pallas_src>

<mosaic_0001>
module attributes {stable_mosaic.version = 11 : i64} {
  func.func @_ce_index_kernel(%arg0: i32, %arg1: memref<8x32xf32, #tpu.memory_space<vmem>>, %arg2: memref<8x1xi32, #tpu.memory_space<vmem>>, %arg3: memref<1x1xf32, #tpu.memory_space<vmem>>, %arg4: memref<1x1xf32, #tpu.memory_space<vmem>>, %arg5: memref<1x1xf32, #tpu.memory_space<vmem>>) attributes {dimension_semantics = [#tpu.dimension_semantics<arbitrary>], iteration_bounds = array<i64: 3>, scalar_prefetch = 0 : i64, scratch_operands = 2 : i64, tpu.core_type = #tpu.core_type<tc>, window_params = [{transform_indices = @transform_0, window_bounds = array<i64: 8, 32>}, {transform_indices = @transform_1, window_bounds = array<i64: 8, 1>}, {pipeline_mode = #tpu.pipeline_mode<synchronous>, transform_indices = @transform_2, window_bounds = array<i64: 1, 1>}]} {
    %c0_i32 = arith.constant 0 : i32
    %0 = arith.cmpi eq, %arg0, %c0_i32 : i32
    %1 = arith.extui %0 : i1 to i32
    %c0_i32_0 = arith.constant 0 : i32
    %2 = arith.cmpi ne, %1, %c0_i32_0 : i32
    scf.if %2 {
      %cst_20 = arith.constant 0.000000e+00 : f32
      %58 = vector.broadcast %cst_20 : f32 to vector<1x1xf32>
      %c0_21 = arith.constant 0 : index
      %c0_22 = arith.constant 0 : index
      %59 = vector.load %arg4[%c0_21, %c0_22] : memref<1x1xf32, #tpu.memory_space<vmem>>, vector<1x1xf32>
      tpu.vector_store %arg4[%c0_21, %c0_22], %58 {strides = array<i32>} : memref<1x1xf32, #tpu.memory_space<vmem>>, vector<1x1xf32>,
      %cst_23 = arith.constant 0.000000e+00 : f32
      %60 = vector.broadcast %cst_23 : f32 to vector<1x1xf32>
      %c0_24 = arith.constant 0 : index
      %c0_25 = arith.constant 0 : index
      %61 = vector.load %arg5[%c0_24, %c0_25] : memref<1x1xf32, #tpu.memory_space<vmem>>, vector<1x1xf32>
      tpu.vector_store %arg5[%c0_24, %c0_25], %60 {strides = array<i32>} : memref<1x1xf32, #tpu.memory_space<vmem>>, vector<1x1xf32>,
    } else {
    }
    %c0 = arith.constant 0 : index
    %c0_1 = arith.constant 0 : index
    %3 = vector.load %arg1[%c0, %c0_1] : memref<8x32xf32, #tpu.memory_space<vmem>>, vector<8x32xf32>
    %c0_2 = arith.constant 0 : index
    %c0_3 = arith.constant 0 : index
    %4 = vector.load %arg2[%c0_2, %c0_3] : memref<8x1xi32, #tpu.memory_space<vmem>>, vector<8x1xi32>
    %5 = tpu.iota {dimensions = array<i32: 0>} : vector<8x1xi32>
    %c8_i32 = arith.constant 8 : i32
    %6 = arith.muli %arg0, %c8_i32 : i32
    %7 = vector.broadcast %6 : i32 to vector<8x1xi32>
    %8 = arith.addi %5, %7 : vector<8x1xi32>
    %c20_i32 = arith.constant 20 : i32
    %9 = vector.broadcast %c20_i32 : i32 to vector<8x1xi32>
    %10 = arith.cmpi slt, %8, %9 : vector<8x1xi32>
    %c-100_i32 = arith.constant -100 : i32
    %11 = vector.broadcast %c-100_i32 : i32 to vector<8x1xi32>
    %12 = arith.cmpi ne, %4, %11 : vector<8x1xi32>
    %13 = arith.andi %10, %12 : vector<8x1xi1>
    %cst = arith.constant 0.000000e+00 : f32
    %14 = vector.shape_cast %10 : vector<8x1xi1> to vector<8x1xi1>
    %15 = vector.broadcast %14 : vector<8x1xi1> to vector<8x32xi1>
    %16 = vector.broadcast %cst : f32 to vector<8x32xf32>
    %17 = arith.select %15, %3, %16 : vector<8x32xi1>, vector<8x32xf32>
    %cst_4 = arith.constant dense<0xFF800000> : vector<8xf32>
    %18 = vector.multi_reduction <maximumf>, %17, %cst_4 [1] : vector<8x32xf32> to vector<8xf32>
    %19 = vector.shape_cast %18 : vector<8xf32> to vector<8x1xf32>
    %20 = vector.broadcast %19 : vector<8x1xf32> to vector<8x32xf32>
    %21 = arith.subf %17, %20 : vector<8x32xf32>
    %22 = math.exp %21 : vector<8x32xf32>
    %cst_5 = arith.constant dense<0.000000e+00> : vector<8xf32>
    %23 = vector.multi_reduction <add>, %22, %cst_5 [1] : vector<8x32xf32> to vector<8xf32>
    %24 = vector.shape_cast %23 : vector<8xf32> to vector<8x1xf32>
    %25 = math.log %24 : vector<8x1xf32>
    %26 = arith.addf %19, %25 : vector<8x1xf32>
    %27 = tpu.iota {dimensions = array<i32: 1>} : vector<8x32xi32>
    %28 = vector.broadcast %4 : vector<8x1xi32> to vector<8x32xi32>
    %29 = arith.cmpi eq, %27, %28 : vector<8x32xi32>
    %cst_6 = arith.constant 0.000000e+00 : f32
    %30 = vector.broadcast %cst_6 : f32 to vector<8x32xf32>
    %31 = arith.select %29, %17, %30 : vector<8x32xi1>, vector<8x32xf32>
    %cst_7 = arith.constant dense<0.000000e+00> : vector<8xf32>
    %32 = vector.multi_reduction <add>, %31, %cst_7 [1] : vector<8x32xf32> to vector<8xf32>
    %33 = vector.shape_cast %32 : vector<8xf32> to vector<8x1xf32>
    %34 = arith.subf %26, %33 : vector<8x1xf32>
    %cst_8 = arith.constant 0.000000e+00 : f32
    %35 = vector.broadcast %cst_8 : f32 to vector<8x1xf32>
    %36 = arith.select %13, %34, %35 : vector<8x1xi1>, vector<8x1xf32>
    %c0_9 = arith.constant 0 : index
    %c0_10 = arith.constant 0 : index
    %37 = vector.load %arg4[%c0_9, %c0_10] : memref<1x1xf32, #tpu.memory_space<vmem>>, vector<1x1xf32>
    %38 = vector.shape_cast %36 : vector<8x1xf32> to vector<1x8x1xf32>
    %cst_11 = arith.constant dense<0.000000e+00> : vector<1xf32>
    %39 = vector.multi_reduction <add>, %38, %cst_11 [1, 2] : vector<1x8x1xf32> to vector<1xf32>
    %40 = vector.shape_cast %39 : vector<1xf32> to vector<1x1x1xf32>
    %41 = vector.extract %40[0, 0, 0] : f32 from vector<1x1x1xf32>
    %42 = vector.broadcast %41 : f32 to vector<1x1xf32>
    %43 = arith.addf %37, %42 : vector<1x1xf32>
    %c0_12 = arith.constant 0 : index
    %c0_13 = arith.constant 0 : index
    %44 = vector.load %arg4[%c0_12, %c0_13] : memref<1x1xf32, #tpu.memory_space<vmem>>, vector<1x1xf32>
    tpu.vector_store %arg4[%c0_12, %c0_13], %43 {strides = array<i32>} : memref<1x1xf32, #tpu.memory_space<vmem>>, vector<1x1xf32>,
    %c0_14 = arith.constant 0 : index
    %c0_15 = arith.constant 0 : index
    %45 = vector.load %arg5[%c0_14, %c0_15] : memref<1x1xf32, #tpu.memory_space<vmem>>, vector<1x1xf32>
    %46 = arith.extui %13 : vector<8x1xi1> to vector<8x1xi32>
    %47 = arith.sitofp %46 : vector<8x1xi32> to vector<8x1xf32>
    %48 = vector.shape_cast %47 : vector<8x1xf32> to vector<1x8x1xf32>
    %cst_16 = arith.constant dense<0.000000e+00> : vector<1xf32>
    %49 = vector.multi_reduction <add>, %48, %cst_16 [1, 2] : vector<1x8x1xf32> to vector<1xf32>
    %50 = vector.shape_cast %49 : vector<1xf32> to vector<1x1x1xf32>
    %51 = vector.extract %50[0, 0, 0] : f32 from vector<1x1x1xf32>
    %52 = vector.broadcast %51 : f32 to vector<1x1xf32>
    %53 = arith.addf %45, %52 : vector<1x1xf32>
    %c0_17 = arith.constant 0 : index
    %c0_18 = arith.constant 0 : index
    %54 = vector.load %arg5[%c0_17, %c0_18] : memref<1x1xf32, #tpu.memory_space<vmem>>, vector<1x1xf32>
    tpu.vector_store %arg5[%c0_17, %c0_18], %53 {strides = array<i32>} : memref<1x1xf32, #tpu.memory_space<vmem>>, vector<1x1xf32>,
    %c2_i32 = arith.constant 2 : i32
    %55 = arith.cmpi eq, %arg0, %c2_i32 : i32
    %56 = arith.extui %55 : i1 to i32
    %c0_i32_19 = arith.constant 0 : i32
    %57 = arith.cmpi ne, %56, %c0_i32_19 : i32
    scf.if %57 {
      %c0_20 = arith.constant 0 : index
      %c0_21 = arith.constant 0 : index
      %58 = vector.load %arg4[%c0_20, %c0_21] : memref<1x1xf32, #tpu.memory_space<vmem>>, vector<1x1xf32>
      %c0_22 = arith.constant 0 : index
      %c0_23 = arith.constant 0 : index
      %59 = vector.load %arg5[%c0_22, %c0_23] : memref<1x1xf32, #tpu.memory_space<vmem>>, vector<1x1xf32>
      %60 = arith.divf %58, %59 : vector<1x1xf32>
      %c0_24 = arith.constant 0 : index
      %c0_25 = arith.constant 0 : index
      %61 = vector.load %arg3[%c0_24, %c0_25] : memref<1x1xf32, #tpu.memory_space<vmem>>, vector<1x1xf32>
      tpu.vector_store %arg3[%c0_24, %c0_25], %60 {strides = array<i32>} : memref<1x1xf32, #tpu.memory_space<vmem>>, vector<1x1xf32>,
    } else {
    }
    return
  }
  func.func @transform_0(%arg0: i32) -> (i32, i32) {
    %c0_i32 = arith.constant 0 : i32
    %c0_i32_0 = arith.constant 0 : i32
    return %arg0, %c0_i32 : i32, i32
  }
  func.func @transform_1(%arg0: i32) -> (i32, i32) {
    %c0_i32 = arith.constant 0 : i32
    %c0_i32_0 = arith.constant 0 : i32
    return %arg0, %c0_i32 : i32, i32
  }
  func.func @transform_2(%arg0: i32) -> (i32, i32) {
    %c0_i32 = arith.constant 0 : i32
    %c0_i32_0 = arith.constant 0 : i32
    %c0_i32_1 = arith.constant 0 : i32
    return %c0_i32, %c0_i32_0 : i32, i32
  }
}

</mosaic_0001>

<llo_original>
// kernel: tpu_custom_call.1
$region0: #{tpu_custom_call.1}
  #allocation0 [shape = 'u32[]', space=smem, size = 0x4, offset = 0x4, fixed_abs, tag = 'smem constant byte address 0x4 - core index']
  #allocation1 [shape = 'u32[72,128]{1,0:T(1,128)}', space=vmem, size = 0x9000, scoped, tag = 'internal scratch']
  #allocation2 [shape = 'f32[1,1]{1,0:T(1,128)}', space=vmem, size = 0x200, scoped, tag = 'scratch operand']
  #allocation3 [shape = 'f32[1,1]{1,0:T(1,128)}', space=vmem, size = 0x200, scoped, tag = 'scratch operand']
  %s0 = inlined_call_operand.vmem [shape: f32[20,32], index: 0, kind: input, shape index: {}]
  %s1 = inlined_call_operand.vmem [shape: s32[20,1], index: 1, kind: input, shape index: {}]
  %s2 = inlined_call_operand.hbm [shape: f32[1,1], index: 2, kind: output, shape index: {}]
  %s3 = sld [smem:[#allocation0]]
  $region49: #{tpu_custom_call.1} parent=0
    _
  %s5 = ssub.s32 1, %s3
  %s6 = scalar_select 0, %s5, %s3
  $region1: #{tpu_custom_call.1} parent=0
    #allocation4 [shape = 'u8[512]{0}', space=vmem, size = 0x400, scoped, tag = 'output window, operand 0, single buffered']
    #allocation5 [shape = 's32[2]{0}', space=sflag, size = 0x8, scoped, tag = 'scoped memory for tpu_custom_call.1']
    %7 = vsyncpa [#allocation5], 0
    loop: start=0, step=1, limit=5
    $region2: #{tpu_custom_call.1} parent=1 // loop_pre_header
      _
    $region3: #{tpu_custom_call.1} parent=1 // loop_header
      %s9 = sphi 0, %s13
      %p10 = scmp.ge.s32.totalorder %s9, 5
      %s19 = sphi 0, %s21
      %s22 = sphi 0, %s19
      %s23 = sphi 0, %s22
      %s39 = sphi 0, %s23
      %s45 = sphi 0, %s47
      %s48 = sphi 0, %s45
      %s49 = sphi 0, %s48
      %s65 = sphi 0, %s49
      %s69 = sphi 0, %s69
      %s71 = sphi 0, %s69
      %s72 = sphi 0, %s71
      %s86 = sphi 0, %s72
    $region4: #{tpu_custom_call.1} parent=1 // loop_header_branch
      %12 = sbr.rel (%p10) target = $region8
    $region5: #{tpu_custom_call.1} parent=1 // loop_body
      %s14 = ssub.s32 %s9, 1
      %s15 = ssub.s32 %s9, 2
      %s16 = sadd.s32 %s9, 1
      %s17 = ssub.s32 %s9, %s16
      %p18 = scmp.eq.s32.totalorder %s17, 0
      %s20 = sadd.s32 %s19, 1
      %s21 = scalar_select %p18, %s19, %s20
      %p24 = pneg %p18
      %p25 = scmp.eq.s32.totalorder %s9, 2
      %p26 = por %p24, %p25
      %p27 = scmp.ne.s32.totalorder %s19, %s22
      %p28 = scmp.eq.s32.totalorder %s9, 0
      %p29 = por %p27, %p28
      %p30 = scmp.ne.s32.totalorder %s19, %s22
      %p31 = scmp.eq.s32.totalorder %s14, 2
      %p32 = por %p30, %p31
      %p33 = scmp.ne.s32.totalorder %s22, %s23
      %p34 = scmp.eq.s32.totalorder %s14, 0
      %p35 = por %p33, %p34
      %p36 = scmp.ne.s32.totalorder %s22, %s23
      %p37 = scmp.eq.s32.totalorder %s15, 2
      %p38 = por %p36, %p37
      %p40 = scmp.ne.s32.totalorder %s23, %s39
      %p41 = scmp.eq.s32.totalorder %s15, 0
      %p42 = por %p40, %p41
      %s43 = ssub.s32 %s9, %s16
      %p44 = scmp.eq.s32.totalorder %s43, 0
      %s46 = sadd.s32 %s45, 1
      %s47 = scalar_select %p44, %s45, %s46
      %p50 = pneg %p44
      %p51 = scmp.eq.s32.totalorder %s9, 2
      %p52 = por %p50, %p51
      %p53 = scmp.ne.s32.totalorder %s45, %s48
      %p54 = scmp.eq.s32.totalorder %s9, 0
      %p55 = por %p53, %p54
      %p56 = scmp.ne.s32.totalorder %s45, %s48
      %p57 = scmp.eq.s32.totalorder %s14, 2
      %p58 = por %p56, %p57
      %p59 = scmp.ne.s32.totalorder %s48, %s49
      %p60 = scmp.eq.s32.totalorder %s14, 0
      %p61 = por %p59, %p60
      %p62 = scmp.ne.s32.totalorder %s48, %s49
      %p63 = scmp.eq.s32.totalorder %s15, 2
      %p64 = por %p62, %p63
      %p66 = scmp.ne.s32.totalorder %s49, %s65
      %p67 = scmp.eq.s32.totalorder %s15, 0
      %p68 = por %p66, %p67
      %s70 = sadd.s32 %s69, 1
      %p73 = scmp.eq.s32.totalorder %s9, 2
      %p74 = scmp.ne.s32.totalorder %s69, %s71
      %p75 = scmp.eq.s32.totalorder %s9, 0
      %p76 = por %p74, %p75
      %p77 = scmp.ne.s32.totalorder %s69, %s71
      %p78 = scmp.eq.s32.totalorder %s14, 2
      %p79 = por %p77, %p78
      %p80 = scmp.ne.s32.totalorder %s71, %s72
      %p81 = scmp.eq.s32.totalorder %s14, 0
      %p82 = por %p80, %p81
      %p83 = scmp.ne.s32.totalorder %s71, %s72
      %p84 = scmp.eq.s32.totalorder %s15, 2
      %p85 = por %p83, %p84
      %p87 = scmp.ne.s32.totalorder %s72, %s86
      %p88 = scmp.eq.s32.totalorder %s15, 0
      %p89 = por %p87, %p88
      %p90 = scmp.le.s32.totalorder 1, %s9
      %p91 = scmp.lt.s32.totalorder %s9, 4
      %p92 = pnand %p90, %p91
      %p93 = pneg %p92
      // Predicated region
      $region9: #{tpu_custom_call.1} parent=5 // pred_check
        _
      $region10: #{tpu_custom_call.1} parent=5 // pred_check_branch
        %95 = sbr.rel (%p92) target = $region12
      $region11: #{tpu_custom_call.1} parent=5 // pred_region
        %s96 = ssub.s32 %s9, 1
      $region12: #{tpu_custom_call.1} parent=5 // pred_fallthru
        _
      %p97 = scmp.lt.s32.totalorder %s9, 3
      // Predicated region
      $region13: #{tpu_custom_call.1} parent=5 // pred_check
        %p98 = pneg %p97
      $region14: #{tpu_custom_call.1} parent=5 // pred_check_branch
        %100 = sbr.rel (%p98) target = $region16
      $region15: #{tpu_custom_call.1} parent=5 // pred_region
        // Predicated region
        $region17: #{tpu_custom_call.1} parent=15 // pred_check
          %p101 = pneg %p29
        $region18: #{tpu_custom_call.1} parent=15 // pred_check_branch
          %103 = sbr.rel (%p101) target = $region20
        $region19: #{tpu_custom_call.1} parent=15 // pred_region
          %p104 = scmp.lt.s32.totalorder %s9, 2
          %s105 = scalar_select %p104, %s9, 2
          %s106 = smul.addr %s105, 8
          %s107 = scalar_lea.vmem %s0, %s106
        $region20: #{tpu_custom_call.1} parent=15 // pred_fallthru
          _
        // Predicated region
        $region21: #{tpu_custom_call.1} parent=15 // pred_check
          %p108 = pneg %p55
        $region22: #{tpu_custom_call.1} parent=15 // pred_check_branch
          %110 = sbr.rel (%p108) target = $region24
        $region23: #{tpu_custom_call.1} parent=15 // pred_region
          %p111 = scmp.lt.s32.totalorder %s9, 2
          %s112 = scalar_select %p111, %s9, 2
          %s113 = smul.addr %s112, 8
          %s114 = scalar_lea.vmem %s1, %s113
        $region24: #{tpu_custom_call.1} parent=15 // pred_fallthru
          _
      $region16: #{tpu_custom_call.1} parent=5 // pred_fallthru
        _
      %p115 = scmp.le.s32.totalorder 1, %s9
      %p116 = scmp.lt.s32.totalorder %s9, 4
      %p117 = pnand %p115, %p116
      %p118 = pneg %p117
      // Predicated region
      $region25: #{tpu_custom_call.1} parent=5 // pred_check
        _
      $region26: #{tpu_custom_call.1} parent=5 // pred_check_branch
        %120 = sbr.rel (%p117) target = $region28
      $region27: #{tpu_custom_call.1} parent=5 // pred_region
        %s121 = ssub.s32 %s9, 1
        %p122 = scmp.lt.s32.totalorder %s14, 2
        %s123 = scalar_select %p122, %s14, 2
        %s124 = smul.addr %s123, 8
        %s125 = scalar_lea.vmem %s0, %s124
        %p126 = pneg %p35
        %p127 = pneg %p32
        %p128 = scmp.lt.s32.totalorder %s14, 2
        %s129 = scalar_select %p128, %s14, 2
        %s130 = smul.addr %s129, 8
        %s131 = scalar_lea.vmem %s1, %s130
        %p132 = pneg %p61
        %p133 = pneg %p58
        %p134 = pneg %p82
        %p135 = pneg %p79
        %p136 = scmp.lt.s32.totalorder %s14, 2
        %s137 = scalar_select %p136, %s14, 2
        %s138 = smul.addr %s137, 8
        %s139 = scalar_lea.vmem %s0, %s138
        %p140 = scmp.lt.s32.totalorder %s14, 2
        %s141 = scalar_select %p140, %s14, 2
        %s142 = smul.addr %s141, 8
        %s143 = scalar_lea.vmem %s1, %s142
        %p144 = scmp.eq.s32.totalorder %s14, 0
        // Predicated region
        $region29: #{tpu_custom_call.1} parent=27 // pred_check
          %p145 = pneg %p144
        $region30: #{tpu_custom_call.1} parent=27 // pred_check_branch
          %147 = sbr.rel (%p145) target = $region32
        $region31: #{tpu_custom_call.1} parent=27 // pred_region
          %vm148 = vcmask 0
          %149 = vst.msk [vmem:[#allocation2] sm:$0x1] %vm148, 0.0
          %150 = vst.msk [vmem:[#allocation3] sm:$0x1] %vm148, 0.0
        $region32: #{tpu_custom_call.1} parent=27 // pred_fallthru
          _
        %v151 = vld [vmem:[%s139] sm:$0xff]
        %v152 = vld [vmem:[%s143] sm:$0xff]
        %v153 = vlaneseq
        %v154 = vshrl.u32 %v153, 7
        %s155 = smul.u32 %s14, 8
        %v156 = vstv %s155
        %v157 = vadd.s32 %v154, %v156
        %vm158 = vcmp.lt.s32.totalorder %v157, 20
        %vm159 = vcmp.ne.s32.totalorder %v152, 4294967196
        %vm160 = vmand %vm158, %vm159
        %v161 = vsel %vm158, 1, 0
        %vm162 = vcmp.eq.s32.totalorder %v161, 1
        %v163 = vsel %vm162, %v151, 0.0
        %vm164 = vcmask 261120
        %v165 = vsel %vm164, %v163, -inf
        %166 = vmax.xlane.f32.xlu0 %v165
        %v167 = vpop.xlane.xlu0 %166
        %v168 = vsub.f32 %v163, %v167
        %v169 = vmul.f32 %v168, 1.442695
        %v170 = vpow.pop %v169
        %v171 = vsel %vm164, %v170, 0.0
        %172 = vadd.xlane.f32.xlu0 %v171
        %v173 = vpop.xlane.xlu0 %172
        %v174 = vlog2.pop %v173
        %v175 = vmul.f32 %v174, 0.6931472
        %v176 = vadd.f32 %v167, %v175
        %v177 = vlaneseq
        %v178 = vand.u32 %v177, 127
        %179 = vset.pattern.permute.xlu0 0
        %180 = vperm.xlu0 %179, %v152
        %v181 = vpop.permute.xlu0 %180
        %vm182 = vcmp.eq.s32.totalorder %v178, %v181
        %v183 = vsel %vm182, %v163, 0.0
        %v184 = vsel %vm164, %v183, 0.0
        %185 = vadd.xlane.f32.xlu0 %v184
        %v186 = vpop.xlane.xlu0 %185
        %v187 = vsub.f32 %v176, %v186
        %v188 = vsel %vm160, %v187, 0.0
        %v189 = vld [vmem:[#allocation2] sm:$0x1]
        %vm190 = vcmask 7168
        %v191 = vsel %vm190, %v188, 0.0
        %192 = vadd.xlane.f32.xlu0 %v191
        %v193 = vpop.xlane.xlu0 %192
        %v194 = vrot.slane %v193, 4
        %v195 = vadd.f32 %v193, %v194
        %v196 = vrot.slane %v195, 2
        %v197 = vadd.f32 %v195, %v196
        %v198 = vrot.slane %v197, 1
        %v199 = vadd.f32 %v197, %v198
        %s200 = vtos %v199
        %v201 = vstv %s200
        %v202 = vadd.f32 %v189, %v201
        %vm203 = vcmask 0
        %204 = vst.msk [vmem:[#allocation2] sm:$0x1] %vm203, %v202
        %v205 = vld [vmem:[#allocation3] sm:$0x1]
        %v206 = vsel %vm160, 1, 0
        %v207 = vcvt.s32.f32 %v206
        %v208 = vsel %vm190, %v207, 0.0
        %209 = vadd.xlane.f32.xlu0 %v208
        %v210 = vpop.xlane.xlu0 %209
        %v211 = vrot.slane %v210, 4
        %v212 = vadd.f32 %v210, %v211
        %v213 = vrot.slane %v212, 2
        %v214 = vadd.f32 %v212, %v213
        %v215 = vrot.slane %v214, 1
        %v216 = vadd.f32 %v214, %v215
        %s217 = vtos %v216
        %v218 = vstv %s217
        %v219 = vadd.f32 %v205, %v218
        %220 = vst.msk [vmem:[#allocation3] sm:$0x1] %vm203, %v219
        %p221 = scmp.eq.s32.totalorder %s14, 2
        // Predicated region
        $region33: #{tpu_custom_call.1} parent=27 // pred_check
          %p222 = pneg %p221
        $region34: #{tpu_custom_call.1} parent=27 // pred_check_branch
          %224 = sbr.rel (%p222) target = $region36
        $region35: #{tpu_custom_call.1} parent=27 // pred_region
          %v225 = vld [vmem:[#allocation2] sm:$0x1]
          %v226 = vld [vmem:[#allocation3] sm:$0x1]
          %v227 = vrcp.pop %v226
          %v228 = vmul.f32 %v226, %v227
          %v229 = vsub.f32 1.0, %v228
          %v230 = vmul.f32 %v227, %v229
          %v231 = vadd.f32 %v227, %v230
          %vm232 = vweird.f32 %v226
          %vm233 = vweird.f32 %v227
          %vm234 = vmor %vm232, %vm233
          %v235 = vsel %vm234, %v227, %v231
          %v236 = vand.u32 2147483647, %v226
          %vm237 = vcmp.eq.f32.partialorder %v236, 8.507059e+37
          %v238 = vand.u32 %v226, 2147483648
          %v239 = vor.u32 1.1754944e-38, %v238
          %v240 = vsel %vm237, %v239, %v235
          %v241 = vmul.f32 %v225, %v240
          %242 = vst.msk [vmem:[#allocation4] sm:$0x1] %vm203, %v241
        $region36: #{tpu_custom_call.1} parent=27 // pred_fallthru
          _
        // Predicated region
        $region37: #{tpu_custom_call.1} parent=27 // pred_check
          %p243 = pneg %p79
        $region38: #{tpu_custom_call.1} parent=27 // pred_check_branch
          %245 = sbr.rel (%p243) target = $region40
        $region39: #{tpu_custom_call.1} parent=27 // pred_region
          %247 = vsyncadd [#allocation5], 0
          %s249 = sshll.u32 [#allocation4], 4
          %s250 = int_to_ptr.vmem [resolvable:$true] %s249
          %s251 = sshll.u32 %s2, 4
          %s252 = int_to_ptr.hbm [resolvable:$true] %s251
          %254 = dma.vmem_to_hbm [thread:$0]  %s250, 16, %s252, [#allocation5]
        $region40: #{tpu_custom_call.1} parent=27 // pred_fallthru
          _
        // Predicated region
        $region41: #{tpu_custom_call.1} parent=27 // pred_check
          %p255 = pneg %p79
        $region42: #{tpu_custom_call.1} parent=27 // pred_check_branch
          %257 = sbr.rel (%p255) target = $region44
        $region43: #{tpu_custom_call.1} parent=27 // pred_region
          %259 = dma.done [#allocation5], 16
        $region44: #{tpu_custom_call.1} parent=27 // pred_fallthru
          _
      $region28: #{tpu_custom_call.1} parent=5 // pred_fallthru
        _
      %p260 = scmp.le.s32.totalorder 2, %s9
      // Predicated region
      $region45: #{tpu_custom_call.1} parent=5 // pred_check
        %p261 = pneg %p260
      $region46: #{tpu_custom_call.1} parent=5 // pred_check_branch
        %263 = sbr.rel (%p261) target = $region48
      $region47: #{tpu_custom_call.1} parent=5 // pred_region
        %s264 = ssub.s32 %s9, 2
      $region48: #{tpu_custom_call.1} parent=5 // pred_fallthru
        _
    $region6: #{tpu_custom_call.1} parent=1 // loop_footer
      %s13 = sadd.s32 1, %s9
    $region7: #{tpu_custom_call.1} parent=1 // loop_footer_branch
      %8 = sbr.rel target = $region3
    $region8: #{tpu_custom_call.1} parent=1 // loop_exit
      _
    %265 = vsyncpa [#allocation5], 1
    %s266 = scalar_lea.sflag [#allocation5], 1
    %267 = vsyncpa %s266, 1

</llo_original>
